<compile_context>
chip_gen: v6e
topology: v6e:2x2x1
jax: 0.10.0
libtpu: 0.0.40
codegen_flags: <defaults>
</compile_context>

<pallas_src>
import functools

import jax
import jax.numpy as jnp
from jax import lax
from jax.experimental import pallas as pl
from jax.experimental.pallas import tpu as pltpu

LANE = 128


def _round_up(x, m):
    return (x + m - 1) // m * m


def _sigmoid(x):
    # Exact sigmoid (matches torch.sigmoid to f32 precision).
    # If the elementwise epilogue ever matters, the divide can be pushed onto
    # the EUP with pl.reciprocal(1.0 + jnp.exp(-x), approx=True).
    return 1.0 / (1.0 + jnp.exp(-x))


def _dhne_kernel(x_ref, wenc_ref, w2_ref, bias_ref, out_ref, *,
                 e_total, hidden, d_total, out_w,
                 off_dec, off_hb, off_ow, off_ob):
    f32 = jnp.float32

    def dot(a, w):
        # cast the activation to the weight dtype (no-op in f32, bf16 on v6e/v7x)
        return jnp.dot(a.astype(w.dtype), w, preferred_element_type=f32)

    x = x_ref[...]                                        # (tb, D_total)

    # ---- fused encoder: one block-diagonal matmul for all three branches ----
    b_enc = bias_ref[:, 0:e_total]                        # (1, E_total)
    emb = jnp.tanh(dot(x, wenc_ref[...]) + b_enc)         # (tb, E_total)

    # ---- fused decoder: block-diag weight, padded to a lane-dense width -----
    w_dec = w2_ref[:, 0:out_w]                            # (E_total, out_w)
    b_dec = bias_ref[:, off_dec:off_dec + out_w]          # (1, out_w)
    dec = _sigmoid(dot(emb, w_dec) + b_dec)               # (tb, out_w) lane-dense

    # ---- merge head: hidden layer (single dot) + 1-wide output layer --------
    hw = w2_ref[:, out_w:out_w + hidden]                  # (E_total, H)
    hb = bias_ref[:, off_hb:off_hb + hidden]              # (1, H)
    ow = bias_ref[:, off_ow:off_ow + hidden]              # (1, H)  output weight row
    ob = bias_ref[:, off_ob:off_ob + 1]                   # (1, 1)

    h = dot(jnp.tanh(emb), hw) + hb                       # (tb, H)
    # output layer has out_features=1 -> VPU mul + lane reduce instead of an
    # MXU pass with 1 useful lane.
    merged = _sigmoid(jnp.sum(h * ow, axis=-1, keepdims=True) + ob)   # (tb, 1)

    # place `merged` into lane d_total of the lane-dense output slab so the
    # whole result goes out as one unmasked full-width store.
    lane_idx = lax.broadcasted_iota(jnp.int32, dec.shape, 1)
    out_ref[...] = jnp.where(lane_idx == d_total, merged, dec)


def _block_diag3(a, b, c):
    """Block-diagonal of three 2-D matrices (wrapper-side glue)."""
    z = lambda r, col: jnp.zeros((r, col), a.dtype)
    top = jnp.concatenate([a, z(a.shape[0], b.shape[1]), z(a.shape[0], c.shape[1])], axis=1)
    mid = jnp.concatenate([z(b.shape[0], a.shape[1]), b, z(b.shape[0], c.shape[1])], axis=1)
    bot = jnp.concatenate([z(c.shape[0], a.shape[1]), z(c.shape[0], b.shape[1]), c], axis=1)
    return jnp.concatenate([top, mid, bot], axis=0)


def _pad_cols(v, width):
    return jnp.pad(v, ((0, 0), (0, width - v.shape[1])))


def dhne_forward(x0, x1, x2, params, embedding_size, hidden_size,
                 compute_dtype=jnp.float32):
    """Runs the DHNE forward as one fused Pallas kernel.

    compute_dtype: keep jnp.float32 on v5e; jnp.bfloat16 is recommended on
    v6e/v7x (weights/activations in bf16, accumulation stays f32).
    """
    B = x0.shape[0]
    d_feat = (x0.shape[1], x1.shape[1], x2.shape[1])
    d_total = sum(d_feat)
    e_total = sum(embedding_size)
    H = hidden_size

    # lane-dense output width: three decoders + 1 merged column, padded to 128
    out_w = _round_up(d_total + 1, LANE)

    # ---- parameter packing (plain JAX glue, outside the kernel) ------------
    w_enc = _block_diag3(params["e0w"], params["e1w"], params["e2w"])   # (D, E)
    w_dec = _block_diag3(params["d0w"], params["d1w"], params["d2w"])   # (E, D)
    w_dec = _pad_cols(w_dec, out_w)                                     # (E, out_w)
    w2 = jnp.concatenate([w_dec, params["hw"]], axis=1)                 # (E, out_w+H)

    # bias / small-vector slab, every segment 128-lane aligned
    off_dec = _round_up(e_total, LANE)
    off_hb = off_dec + out_w
    off_ow = off_hb + _round_up(H, LANE)
    off_ob = off_ow + _round_up(H, LANE)
    bias_w = off_ob + LANE

    b_enc = jnp.concatenate([params["e0b"], params["e1b"], params["e2b"]], axis=1)
    b_dec = jnp.concatenate([params["d0b"], params["d1b"], params["d2b"]], axis=1)
    bias = jnp.concatenate([
        _pad_cols(b_enc, off_dec),                 # [0, off_dec)
        _pad_cols(b_dec, out_w),                   # [off_dec, off_hb)
        _pad_cols(params["hb"], off_ow - off_hb),  # [off_hb, off_ow)
        _pad_cols(params["ow"].T, off_ob - off_ow),  # output weight as a row
        _pad_cols(params["ob"], LANE),             # [off_ob, bias_w)
    ], axis=1).astype(jnp.float32)
    assert bias.shape == (1, bias_w)

    # ---- batch tiling (parallel grid -> shards across v7x's 2 TensorCores) --
    tile_b = 256 if B >= 512 else _round_up(B, 8)
    b_pad = _round_up(B, tile_b)

    x_cat = jnp.concatenate([x0, x1, x2], axis=1)           # (B, D_total)
    if b_pad != B:
        x_cat = jnp.pad(x_cat, ((0, b_pad - B), (0, 0)))

    x_cat = x_cat.astype(compute_dtype)
    w_enc = w_enc.astype(compute_dtype)
    w2 = w2.astype(compute_dtype)

    kernel = functools.partial(
        _dhne_kernel,
        e_total=e_total, hidden=H, d_total=d_total, out_w=out_w,
        off_dec=off_dec, off_hb=off_hb, off_ow=off_ow, off_ob=off_ob)

    out = pl.pallas_call(
        kernel,
        out_shape=jax.ShapeDtypeStruct((b_pad, out_w), jnp.float32),
        grid=(b_pad // tile_b,),
        in_specs=[
            pl.BlockSpec((tile_b, d_total), lambda i: (i, 0)),     # x slab
            pl.BlockSpec((d_total, e_total), lambda i: (0, 0)),    # encoder weight
            pl.BlockSpec((e_total, out_w + H), lambda i: (0, 0)),  # decoder|hidden weight
            pl.BlockSpec((1, bias_w), lambda i: (0, 0)),           # bias/vector slab
        ],
        out_specs=pl.BlockSpec((tile_b, out_w), lambda i: (i, 0)),
        compiler_params=pltpu.CompilerParams(
            dimension_semantics=("parallel",)),
    )(x_cat, w_enc, w2, bias)

    d0, d1, d2 = d_feat
    dec0 = out[:B, 0:d0]
    dec1 = out[:B, d0:d0 + d1]
    dec2 = out[:B, d0 + d1:d_total]
    merged = out[:B, d_total:d_total + 1]
    return dec0, dec1, dec2, merged


def make_params(key, dim_feature, embedding_size, hidden_size):
    """PyTorch nn.Linear-style init; weights stored as [in, out] (transposed)."""
    params = {}

    def linear_init(key, fan_in, fan_out):
        kw, kb = jax.random.split(key)
        bound = 1.0 / jnp.sqrt(float(fan_in))
        w = jax.random.uniform(kw, (fan_in, fan_out), jnp.float32, -bound, bound)
        b = jax.random.uniform(kb, (1, fan_out), jnp.float32, -bound, bound)
        return w, b

    keys = jax.random.split(key, 8)
    params["e0w"], params["e0b"] = linear_init(keys[0], dim_feature[0], embedding_size[0])
    params["e1w"], params["e1b"] = linear_init(keys[1], dim_feature[1], embedding_size[1])
    params["e2w"], params["e2b"] = linear_init(keys[2], dim_feature[2], embedding_size[2])
    params["d0w"], params["d0b"] = linear_init(keys[3], embedding_size[0], dim_feature[0])
    params["d1w"], params["d1b"] = linear_init(keys[4], embedding_size[1], dim_feature[1])
    params["d2w"], params["d2b"] = linear_init(keys[5], embedding_size[2], dim_feature[2])
    params["hw"], params["hb"] = linear_init(keys[6], sum(embedding_size), hidden_size)
    params["ow"], params["ob"] = linear_init(keys[7], hidden_size, 1)
    return params


def reference_forward(x0, x1, x2, params):
    """Pure-JAX reference mirroring the PyTorch forward exactly (unfused)."""
    def lin(x, w, b):
        return x @ w + b

    emb0 = jnp.tanh(lin(x0, params["e0w"], params["e0b"]))
    dec0 = jax.nn.sigmoid(lin(emb0, params["d0w"], params["d0b"]))
    emb1 = jnp.tanh(lin(x1, params["e1w"], params["e1b"]))
    dec1 = jax.nn.sigmoid(lin(emb1, params["d1w"], params["d1b"]))
    emb2 = jnp.tanh(lin(x2, params["e2w"], params["e2b"]))
    dec2 = jax.nn.sigmoid(lin(emb2, params["d2w"], params["d2b"]))
    merged = jnp.tanh(jnp.concatenate([emb0, emb1, emb2], axis=1))
    merged = lin(merged, params["hw"], params["hb"])
    merged = lin(merged, params["ow"], params["ob"])
    merged = jax.nn.sigmoid(merged)
    return dec0, dec1, dec2, merged


if __name__ == "__main__":
    batch = 8
    dim_feature = (16, 24, 32)
    embedding_size = (8, 8, 16)   # sum = 32
    hidden_size = 32

    key = jax.random.PRNGKey(0)
    kp, k0, k1, k2 = jax.random.split(key, 4)
    params = make_params(kp, dim_feature, embedding_size, hidden_size)

    x0 = jax.random.normal(k0, (batch, dim_feature[0]), jnp.float32)
    x1 = jax.random.normal(k1, (batch, dim_feature[1]), jnp.float32)
    x2 = jax.random.normal(k2, (batch, dim_feature[2]), jnp.float32)

    # f32 everywhere (safe on v5e/v6e/v7x); pass compute_dtype=jnp.bfloat16 on
    # v6e/v7x for the bf16-MXU / half-DMA variant.
    dec0, dec1, dec2, merged = jax.block_until_ready(
        dhne_forward(x0, x1, x2, params, embedding_size, hidden_size)
    )

    r0, r1, r2, rm = reference_forward(x0, x1, x2, params)
    assert jnp.allclose(dec0, r0, atol=1e-5), "decode0 mismatch"
    assert jnp.allclose(dec1, r1, atol=1e-5), "decode1 mismatch"
    assert jnp.allclose(dec2, r2, atol=1e-5), "decode2 mismatch"
    assert jnp.allclose(merged, rm, atol=1e-5), "merged mismatch"
    assert merged.shape == (batch, 1)

    print("KERNEL_OK")
</pallas_src>

<mosaic_0001>
module attributes {stable_mosaic.version = 11 : i64} {
  func.func @_dhne_kernel(%arg0: i32, %arg1: memref<8x72xf32, #tpu.memory_space<vmem>>, %arg2: memref<72x32xf32, #tpu.memory_space<vmem>>, %arg3: memref<32x160xf32, #tpu.memory_space<vmem>>, %arg4: memref<1x640xf32, #tpu.memory_space<vmem>>, %arg5: memref<8x128xf32, #tpu.memory_space<vmem>>) attributes {dimension_semantics = [#tpu.dimension_semantics<parallel>], iteration_bounds = array<i64: 1>, scalar_prefetch = 0 : i64, scratch_operands = 0 : i64, tpu.core_type = #tpu.core_type<tc>, window_params = [{transform_indices = @transform_0, window_bounds = array<i64: 8, 72>}, {pipeline_mode = #tpu.pipeline_mode<synchronous>, transform_indices = @transform_1, window_bounds = array<i64: 72, 32>}, {pipeline_mode = #tpu.pipeline_mode<synchronous>, transform_indices = @transform_2, window_bounds = array<i64: 32, 160>}, {pipeline_mode = #tpu.pipeline_mode<synchronous>, transform_indices = @transform_3, window_bounds = array<i64: 1, 640>}, {transform_indices = @transform_4, window_bounds = array<i64: 8, 128>}]} {
    %c0 = arith.constant 0 : index
    %c0_0 = arith.constant 0 : index
    %0 = vector.load %arg1[%c0, %c0_0] : memref<8x72xf32, #tpu.memory_space<vmem>>, vector<8x72xf32>
    %c0_1 = arith.constant 0 : index
    %c0_2 = arith.constant 0 : index
    %1 = vector.load %arg4[%c0_1, %c0_2] : memref<1x640xf32, #tpu.memory_space<vmem>>, vector<1x32xf32>
    %c0_3 = arith.constant 0 : index
    %c0_4 = arith.constant 0 : index
    %2 = vector.load %arg2[%c0_3, %c0_4] : memref<72x32xf32, #tpu.memory_space<vmem>>, vector<72x32xf32>
    %cst = arith.constant dense<0.000000e+00> : vector<8x32xf32>
    %3 = tpu.matmul %0, %2, %cst {dimension_numbers = #tpu.dot_dimension_numbers<[1], [0], [0], [1], [0, 0, 1, 1], [], []>} : vector<8x72xf32>, vector<72x32xf32>, vector<8x32xf32> -> vector<8x32xf32>
    %4 = vector.broadcast %1 : vector<1x32xf32> to vector<8x32xf32>
    %5 = arith.addf %3, %4 : vector<8x32xf32>
    %6 = math.tanh %5 : vector<8x32xf32>
    %c0_5 = arith.constant 0 : index
    %c0_6 = arith.constant 0 : index
    %7 = vector.load %arg3[%c0_5, %c0_6] : memref<32x160xf32, #tpu.memory_space<vmem>>, vector<32x128xf32>
    %c0_7 = arith.constant 0 : index
    %c128 = arith.constant 128 : index
    %8 = vector.load %arg4[%c0_7, %c128] : memref<1x640xf32, #tpu.memory_space<vmem>>, vector<1x128xf32>
    %cst_8 = arith.constant dense<0.000000e+00> : vector<8x128xf32>
    %9 = tpu.matmul %6, %7, %cst_8 {dimension_numbers = #tpu.dot_dimension_numbers<[1], [0], [0], [1], [0, 0, 1, 1], [], []>} : vector<8x32xf32>, vector<32x128xf32>, vector<8x128xf32> -> vector<8x128xf32>
    %10 = vector.broadcast %8 : vector<1x128xf32> to vector<8x128xf32>
    %11 = arith.addf %9, %10 : vector<8x128xf32>
    %cst_9 = arith.constant 0.000000e+00 : f32
    %12 = vector.broadcast %cst_9 : f32 to vector<8x128xf32>
    %13 = arith.subf %12, %11 : vector<8x128xf32>
    %14 = math.exp %13 : vector<8x128xf32>
    %cst_10 = arith.constant 1.000000e+00 : f32
    %15 = vector.broadcast %cst_10 : f32 to vector<8x128xf32>
    %16 = arith.addf %15, %14 : vector<8x128xf32>
    %cst_11 = arith.constant 1.000000e+00 : f32
    %17 = vector.broadcast %cst_11 : f32 to vector<8x128xf32>
    %18 = arith.divf %17, %16 : vector<8x128xf32>
    %c0_12 = arith.constant 0 : index
    %c128_13 = arith.constant 128 : index
    %19 = vector.load %arg3[%c0_12, %c128_13] : memref<32x160xf32, #tpu.memory_space<vmem>>, vector<32x32xf32>
    %c0_14 = arith.constant 0 : index
    %c256 = arith.constant 256 : index
    %20 = vector.load %arg4[%c0_14, %c256] : memref<1x640xf32, #tpu.memory_space<vmem>>, vector<1x32xf32>
    %c0_15 = arith.constant 0 : index
    %c384 = arith.constant 384 : index
    %21 = vector.load %arg4[%c0_15, %c384] : memref<1x640xf32, #tpu.memory_space<vmem>>, vector<1x32xf32>
    %c0_16 = arith.constant 0 : index
    %c512 = arith.constant 512 : index
    %22 = vector.load %arg4[%c0_16, %c512] : memref<1x640xf32, #tpu.memory_space<vmem>>, vector<1x1xf32>
    %23 = math.tanh %6 : vector<8x32xf32>
    %cst_17 = arith.constant dense<0.000000e+00> : vector<8x32xf32>
    %24 = tpu.matmul %23, %19, %cst_17 {dimension_numbers = #tpu.dot_dimension_numbers<[1], [0], [0], [1], [0, 0, 1, 1], [], []>} : vector<8x32xf32>, vector<32x32xf32>, vector<8x32xf32> -> vector<8x32xf32>
    %25 = vector.broadcast %20 : vector<1x32xf32> to vector<8x32xf32>
    %26 = arith.addf %24, %25 : vector<8x32xf32>
    %27 = vector.broadcast %21 : vector<1x32xf32> to vector<8x32xf32>
    %28 = arith.mulf %26, %27 : vector<8x32xf32>
    %cst_18 = arith.constant dense<0.000000e+00> : vector<8xf32>
    %29 = vector.multi_reduction <add>, %28, %cst_18 [1] : vector<8x32xf32> to vector<8xf32>
    %30 = vector.shape_cast %29 : vector<8xf32> to vector<8x1xf32>
    %31 = vector.broadcast %22 : vector<1x1xf32> to vector<8x1xf32>
    %32 = arith.addf %30, %31 : vector<8x1xf32>
    %cst_19 = arith.constant 0.000000e+00 : f32
    %33 = vector.broadcast %cst_19 : f32 to vector<8x1xf32>
    %34 = arith.subf %33, %32 : vector<8x1xf32>
    %35 = math.exp %34 : vector<8x1xf32>
    %cst_20 = arith.constant 1.000000e+00 : f32
    %36 = vector.broadcast %cst_20 : f32 to vector<8x1xf32>
    %37 = arith.addf %36, %35 : vector<8x1xf32>
    %cst_21 = arith.constant 1.000000e+00 : f32
    %38 = vector.broadcast %cst_21 : f32 to vector<8x1xf32>
    %39 = arith.divf %38, %37 : vector<8x1xf32>
    %40 = tpu.iota {dimensions = array<i32: 1>} : vector<8x128xi32>
    %c72_i32 = arith.constant 72 : i32
    %41 = vector.broadcast %c72_i32 : i32 to vector<8x128xi32>
    %42 = arith.cmpi eq, %40, %41 : vector<8x128xi32>
    %43 = vector.shape_cast %39 : vector<8x1xf32> to vector<8x1xf32>
    %44 = vector.broadcast %43 : vector<8x1xf32> to vector<8x128xf32>
    %45 = arith.select %42, %44, %18 : vector<8x128xi1>, vector<8x128xf32>
    %c0_22 = arith.constant 0 : index
    %c0_23 = arith.constant 0 : index
    %46 = vector.load %arg5[%c0_22, %c0_23] : memref<8x128xf32, #tpu.memory_space<vmem>>, vector<8x128xf32>
    tpu.vector_store %arg5[%c0_22, %c0_23], %45 {strides = array<i32>} : memref<8x128xf32, #tpu.memory_space<vmem>>, vector<8x128xf32>,
    return
  }
  func.func @transform_0(%arg0: i32) -> (i32, i32) {
    %c0_i32 = arith.constant 0 : i32
    %c0_i32_0 = arith.constant 0 : i32
    return %arg0, %c0_i32 : i32, i32
  }
  func.func @transform_1(%arg0: i32) -> (i32, i32) {
    %c0_i32 = arith.constant 0 : i32
    %c0_i32_0 = arith.constant 0 : i32
    %c0_i32_1 = arith.constant 0 : i32
    return %c0_i32, %c0_i32_0 : i32, i32
  }
  func.func @transform_2(%arg0: i32) -> (i32, i32) {
    %c0_i32 = arith.constant 0 : i32
    %c0_i32_0 = arith.constant 0 : i32
    %c0_i32_1 = arith.constant 0 : i32
    return %c0_i32, %c0_i32_0 : i32, i32
  }
  func.func @transform_3(%arg0: i32) -> (i32, i32) {
    %c0_i32 = arith.constant 0 : i32
    %c0_i32_0 = arith.constant 0 : i32
    %c0_i32_1 = arith.constant 0 : i32
    return %c0_i32, %c0_i32_0 : i32, i32
  }
  func.func @transform_4(%arg0: i32) -> (i32, i32) {
    %c0_i32 = arith.constant 0 : i32
    %c0_i32_0 = arith.constant 0 : i32
    return %arg0, %c0_i32 : i32, i32
  }
}

</mosaic_0001>

<llo_original>
// kernel: tpu_custom_call.1
$region0: #{tpu_custom_call.1}
  #allocation0 [shape = 'u32[]', space=smem, size = 0x4, offset = 0x4, fixed_abs, tag = 'smem constant byte address 0x4 - core index']
  #allocation1 [shape = 'u32[144,128]{1,0:T(1,128)}', space=vmem, size = 0x12000, scoped, tag = 'internal scratch']
  %s0 = inlined_call_operand.vmem [shape: f32[8,72], index: 0, kind: input, shape index: {}]
  %s1 = inlined_call_operand.vmem [shape: f32[72,32], index: 1, kind: input, shape index: {}]
  %s2 = inlined_call_operand.vmem [shape: f32[32,160], index: 2, kind: input, shape index: {}]
  %s3 = inlined_call_operand.vmem [shape: f32[1,640], index: 3, kind: input, shape index: {}]
  %s4 = inlined_call_operand.hbm [shape: f32[8,128], index: 4, kind: output, shape index: {}]
  %s5 = sld [smem:[#allocation0]]
  $region26: #{tpu_custom_call.1} parent=0
    _
  %s7 = ssub.s32 1, %s5
  %s8 = scalar_select 0, %s7, %s5
  $region1: #{tpu_custom_call.1} parent=0
    #allocation2 [shape = 'u8[4096]{0}', space=vmem, size = 0x1000, scoped, tag = 'output window, operand 0, single buffered']
    #allocation3 [shape = 's32[1]{0}', space=sflag, size = 0x4, scoped, tag = 'scoped memory for tpu_custom_call.1']
    %9 = vsyncpa [#allocation3], 0
    // Predicated region
    $region2: #{tpu_custom_call.1} parent=1 // pred_check
      _
    $region3: #{tpu_custom_call.1} parent=1 // pred_check_branch
      %11 = sbr.rel (0) target = $region5
    $region4: #{tpu_custom_call.1} parent=1 // pred_region
      _
    $region5: #{tpu_custom_call.1} parent=1 // pred_fallthru
      _
    // Predicated region
    $region6: #{tpu_custom_call.1} parent=1 // pred_check
      _
    $region7: #{tpu_custom_call.1} parent=1 // pred_check_branch
      %13 = sbr.rel (0) target = $region9
    $region8: #{tpu_custom_call.1} parent=1 // pred_region
      _
    $region9: #{tpu_custom_call.1} parent=1 // pred_fallthru
      _
    // Predicated region
    $region10: #{tpu_custom_call.1} parent=1 // pred_check
      _
    $region11: #{tpu_custom_call.1} parent=1 // pred_check_branch
      %15 = sbr.rel (0) target = $region13
    $region12: #{tpu_custom_call.1} parent=1 // pred_region
      _
    $region13: #{tpu_custom_call.1} parent=1 // pred_fallthru
      _
    // Predicated region
    $region14: #{tpu_custom_call.1} parent=1 // pred_check
      _
    $region15: #{tpu_custom_call.1} parent=1 // pred_check_branch
      %17 = sbr.rel (0) target = $region17
    $region16: #{tpu_custom_call.1} parent=1 // pred_region
      _
    $region17: #{tpu_custom_call.1} parent=1 // pred_fallthru
      _
    %v18 = vld [vmem:[%s0] sm:$0xff]
    %v19 = vld [vmem:[%s3] sm:$0x1]
    %v20 = vld [vmem:[%s1] sm:$0xff]
    %v21 = vld [vmem:[%s1 + $0x8] sm:$0xff]
    %v22 = vld [vmem:[%s1 + $0x10] sm:$0xff]
    %v23 = vld [vmem:[%s1 + $0x18] sm:$0xff]
    %v24 = vld [vmem:[%s1 + $0x20] sm:$0xff]
    %v25 = vld [vmem:[%s1 + $0x28] sm:$0xff]
    %v26 = vld [vmem:[%s1 + $0x30] sm:$0xff]
    %v27 = vld [vmem:[%s1 + $0x38] sm:$0xff]
    %v28 = vld [vmem:[%s1 + $0x40] sm:$0xff]
    %v30 = vlaneseq
    %v31 = vshrl.u32 %v30, 7
    %v32 = vsub.s32 0, %v31
    %v33 = vrot.slane %v19, %v32
    %vm35 = vcmask 588800
    %v37 = vsel %vm35, %v18, 0
    %39 = vmatprep.subr.mxu0 0.0
    %40 = vmatpush1.msra.mxu0 0.0
    %41 = vmatprep.subr.mxu0 0.0
    %42 = vmatpush1.msra.mxu0 0.0
    %43 = vmatprep.subr.mxu0 0.0
    %44 = vmatpush1.msra.mxu0 0.0
    %45 = vmatprep.subr.mxu0 0.0
    %46 = vmatpush1.msra.mxu0 0.0
    %47 = vmatprep.subr.mxu0 0.0
    %48 = vmatpush1.msra.mxu0 0.0
    %49 = vmatprep.subr.mxu0 0.0
    %50 = vmatpush1.msra.mxu0 0.0
    %51 = vmatprep.subr.mxu0 0.0
    %52 = vmatpush1.msra.mxu0 0.0
    %53 = vmatprep.subr.mxu0 0.0
    %54 = vmatpush1.msra.mxu0 %v28
    %55 = vmatprep.subr.mxu0 0.0
    %56 = vmatpush1.msra.mxu0 %v27
    %57 = vmatprep.subr.mxu0 0.0
    %58 = vmatpush1.msra.mxu0 %v26
    %59 = vmatprep.subr.mxu0 0.0
    %60 = vmatpush1.msra.mxu0 %v25
    %61 = vmatprep.subr.mxu0 0.0
    %62 = vmatpush1.msra.mxu0 %v24
    %63 = vmatprep.subr.mxu0 0.0
    %64 = vmatpush1.msra.mxu0 %v23
    %65 = vmatprep.subr.mxu0 0.0
    %66 = vmatpush1.msra.mxu0 %v22
    %67 = vmatprep.subr.mxu0 0.0
    %68 = vmatpush1.msra.mxu0 %v21
    %69 = vmatprep.subr.mxu0 0.0
    %70 = vmatpush1.msra.mxu0 %v20
    %71 = vmatprep.subr.mxu0 0.0
    %72 = vmatpush2.msra.mxu0 0.0
    %73 = vmatprep.subr.mxu0 0.0
    %74 = vmatpush2.msra.mxu0 0.0
    %75 = vmatprep.subr.mxu0 0.0
    %76 = vmatpush2.msra.mxu0 0.0
    %77 = vmatprep.subr.mxu0 0.0
    %78 = vmatpush2.msra.mxu0 0.0
    %79 = vmatprep.subr.mxu0 0.0
    %80 = vmatpush2.msra.mxu0 0.0
    %81 = vmatprep.subr.mxu0 0.0
    %82 = vmatpush2.msra.mxu0 0.0
    %83 = vmatprep.subr.mxu0 0.0
    %84 = vmatpush2.msra.mxu0 0.0
    %85 = vmatprep.subr.mxu0 0.0
    %86 = vmatpush2.msra.mxu0 0.0
    %87 = vmatprep.subr.mxu0 0.0
    %88 = vmatpush2.msra.mxu0 0.0
    %89 = vmatprep.subr.mxu0 0.0
    %90 = vmatpush2.msra.mxu0 0.0
    %91 = vmatprep.subr.mxu0 0.0
    %92 = vmatpush2.msra.mxu0 0.0
    %93 = vmatprep.subr.mxu0 0.0
    %94 = vmatpush2.msra.mxu0 0.0
    %95 = vmatprep.subr.mxu0 0.0
    %96 = vmatpush2.msra.mxu0 0.0
    %97 = vmatprep.subr.mxu0 0.0
    %98 = vmatpush2.msra.mxu0 0.0
    %99 = vmatprep.subr.mxu0 0.0
    %100 = vmatpush2.msra.mxu0 0.0
    %101 = vmatprep.subr.mxu0 0.0
    %102 = vmatpush2.msra.mxu0 0.0
    %103 = vmatprep.mubr.f32.mxu0 0.0
    %104 = vmatmul.mubr.f32.gmra.mxu0 %v37
    %v105 = vpop.f32.mrf.mxu0
    %v106 = vadd.f32 %v33, %v105
    %v107 = vpop.f32.mrf.mxu0
    %108 = vdwg.mxu0
    %v109 = vtanh.pop %v106
    %v110 = vld [vmem:[%s2] sm:$0xff]
    %v111 = vld [vmem:[%s2 + $0x10] sm:$0xff]
    %v112 = vld [vmem:[%s2 + $0x20] sm:$0xff]
    %v113 = vld [vmem:[%s2 + $0x30] sm:$0xff]
    %v114 = vld [vmem:[%s3 + $0x1] sm:$0x1]
    %v116 = vlaneseq
    %v117 = vshrl.u32 %v116, 7
    %v118 = vsub.s32 0, %v117
    %v119 = vrot.slane %v114, %v118
    %vm121 = vcmask 261120
    %v123 = vsel %vm121, %v109, 0
    %125 = vmatprep.subr.mxu0 0.0
    %126 = vmatpush1.msra.mxu0 0.0
    %127 = vmatprep.subr.mxu0 0.0
    %128 = vmatpush1.msra.mxu0 0.0
    %129 = vmatprep.subr.mxu0 0.0
    %130 = vmatpush1.msra.mxu0 0.0
    %131 = vmatprep.subr.mxu0 0.0
    %132 = vmatpush1.msra.mxu0 0.0
    %133 = vmatprep.subr.mxu0 0.0
    %134 = vmatpush1.msra.mxu0 0.0
    %135 = vmatprep.subr.mxu0 0.0
    %136 = vmatpush1.msra.mxu0 0.0
    %137 = vmatprep.subr.mxu0 0.0
    %138 = vmatpush1.msra.mxu0 0.0
    %139 = vmatprep.subr.mxu0 0.0
    %140 = vmatpush1.msra.mxu0 0.0
    %141 = vmatprep.subr.mxu0 0.0
    %142 = vmatpush1.msra.mxu0 0.0
    %143 = vmatprep.subr.mxu0 0.0
    %144 = vmatpush1.msra.mxu0 0.0
    %145 = vmatprep.subr.mxu0 0.0
    %146 = vmatpush1.msra.mxu0 0.0
    %147 = vmatprep.subr.mxu0 0.0
    %148 = vmatpush1.msra.mxu0 0.0
    %149 = vmatprep.subr.mxu0 0.0
    %150 = vmatpush1.msra.mxu0 %v113
    %151 = vmatprep.subr.mxu0 0.0
    %152 = vmatpush1.msra.mxu0 %v112
    %153 = vmatprep.subr.mxu0 0.0
    %154 = vmatpush1.msra.mxu0 %v111
    %155 = vmatprep.subr.mxu0 0.0
    %156 = vmatpush1.msra.mxu0 %v110
    %157 = vmatprep.subr.mxu0 0.0
    %158 = vmatpush2.msra.mxu0 0.0
    %159 = vmatprep.subr.mxu0 0.0
    %160 = vmatpush2.msra.mxu0 0.0
    %161 = vmatprep.subr.mxu0 0.0
    %162 = vmatpush2.msra.mxu0 0.0
    %163 = vmatprep.subr.mxu0 0.0
    %164 = vmatpush2.msra.mxu0 0.0
    %165 = vmatprep.subr.mxu0 0.0
    %166 = vmatpush2.msra.mxu0 0.0
    %167 = vmatprep.subr.mxu0 0.0
    %168 = vmatpush2.msra.mxu0 0.0
    %169 = vmatprep.subr.mxu0 0.0
    %170 = vmatpush2.msra.mxu0 0.0
    %171 = vmatprep.subr.mxu0 0.0
    %172 = vmatpush2.msra.mxu0 0.0
    %173 = vmatprep.subr.mxu0 0.0
    %174 = vmatpush2.msra.mxu0 0.0
    %175 = vmatprep.subr.mxu0 0.0
    %176 = vmatpush2.msra.mxu0 0.0
    %177 = vmatprep.subr.mxu0 0.0
    %178 = vmatpush2.msra.mxu0 0.0
    %179 = vmatprep.subr.mxu0 0.0
    %180 = vmatpush2.msra.mxu0 0.0
    %181 = vmatprep.subr.mxu0 0.0
    %182 = vmatpush2.msra.mxu0 0.0
    %183 = vmatprep.subr.mxu0 0.0
    %184 = vmatpush2.msra.mxu0 0.0
    %185 = vmatprep.subr.mxu0 0.0
    %186 = vmatpush2.msra.mxu0 0.0
    %187 = vmatprep.subr.mxu0 0.0
    %188 = vmatpush2.msra.mxu0 0.0
    %189 = vmatprep.mubr.f32.mxu0 0.0
    %190 = vmatmul.mubr.f32.gmra.mxu0 %v123
    %v191 = vpop.f32.mrf.mxu0
    %v192 = vadd.f32 %v119, %v191
    %v193 = vpop.f32.mrf.mxu0
    %194 = vdwg.mxu0
    %v195 = vsub.f32 0.0, %v192
    %v196 = vmul.f32 %v195, 1.442695
    %v197 = vpow.pop %v196
    %v198 = vadd.f32 %v197, 1.0
    %v199 = vrcp.pop %v198
    %v200 = vmul.f32 1.0, %v199
    %v201 = vld [vmem:[%s2 + $0x8] sm:$0xff]
    %v202 = vld [vmem:[%s2 + $0x18] sm:$0xff]
    %v203 = vld [vmem:[%s2 + $0x28] sm:$0xff]
    %v204 = vld [vmem:[%s2 + $0x38] sm:$0xff]
    %v205 = vld [vmem:[%s3 + $0x2] sm:$0x1]
    %v206 = vld [vmem:[%s3 + $0x3] sm:$0x1]
    %v207 = vld [vmem:[%s3 + $0x4] sm:$0x1]
    %v208 = vtanh.pop %v109
    %v210 = vlaneseq
    %v211 = vshrl.u32 %v210, 7
    %v212 = vsub.s32 0, %v211
    %v213 = vrot.slane %v205, %v212
    %v216 = vsel %vm121, %v208, 0
    %218 = vmatprep.subr.mxu0 0.0
    %219 = vmatpush1.msra.mxu0 0.0
    %220 = vmatprep.subr.mxu0 0.0
    %221 = vmatpush1.msra.mxu0 0.0
    %222 = vmatprep.subr.mxu0 0.0
    %223 = vmatpush1.msra.mxu0 0.0
    %224 = vmatprep.subr.mxu0 0.0
    %225 = vmatpush1.msra.mxu0 0.0
    %226 = vmatprep.subr.mxu0 0.0
    %227 = vmatpush1.msra.mxu0 0.0
    %228 = vmatprep.subr.mxu0 0.0
    %229 = vmatpush1.msra.mxu0 0.0
    %230 = vmatprep.subr.mxu0 0.0
    %231 = vmatpush1.msra.mxu0 0.0
    %232 = vmatprep.subr.mxu0 0.0
    %233 = vmatpush1.msra.mxu0 0.0
    %234 = vmatprep.subr.mxu0 0.0
    %235 = vmatpush1.msra.mxu0 0.0
    %236 = vmatprep.subr.mxu0 0.0
    %237 = vmatpush1.msra.mxu0 0.0
    %238 = vmatprep.subr.mxu0 0.0
    %239 = vmatpush1.msra.mxu0 0.0
    %240 = vmatprep.subr.mxu0 0.0
    %241 = vmatpush1.msra.mxu0 0.0
    %242 = vmatprep.subr.mxu0 0.0
    %243 = vmatpush1.msra.mxu0 %v204
    %244 = vmatprep.subr.mxu0 0.0
    %245 = vmatpush1.msra.mxu0 %v203
    %246 = vmatprep.subr.mxu0 0.0
    %247 = vmatpush1.msra.mxu0 %v202
    %248 = vmatprep.subr.mxu0 0.0
    %249 = vmatpush1.msra.mxu0 %v201
    %250 = vmatprep.subr.mxu0 0.0
    %251 = vmatpush2.msra.mxu0 0.0
    %252 = vmatprep.subr.mxu0 0.0
    %253 = vmatpush2.msra.mxu0 0.0
    %254 = vmatprep.subr.mxu0 0.0
    %255 = vmatpush2.msra.mxu0 0.0
    %256 = vmatprep.subr.mxu0 0.0
    %257 = vmatpush2.msra.mxu0 0.0
    %258 = vmatprep.subr.mxu0 0.0
    %259 = vmatpush2.msra.mxu0 0.0
    %260 = vmatprep.subr.mxu0 0.0
    %261 = vmatpush2.msra.mxu0 0.0
    %262 = vmatprep.subr.mxu0 0.0
    %263 = vmatpush2.msra.mxu0 0.0
    %264 = vmatprep.subr.mxu0 0.0
    %265 = vmatpush2.msra.mxu0 0.0
    %266 = vmatprep.subr.mxu0 0.0
    %267 = vmatpush2.msra.mxu0 0.0
    %268 = vmatprep.subr.mxu0 0.0
    %269 = vmatpush2.msra.mxu0 0.0
    %270 = vmatprep.subr.mxu0 0.0
    %271 = vmatpush2.msra.mxu0 0.0
    %272 = vmatprep.subr.mxu0 0.0
    %273 = vmatpush2.msra.mxu0 0.0
    %274 = vmatprep.subr.mxu0 0.0
    %275 = vmatpush2.msra.mxu0 0.0
    %276 = vmatprep.subr.mxu0 0.0
    %277 = vmatpush2.msra.mxu0 0.0
    %278 = vmatprep.subr.mxu0 0.0
    %279 = vmatpush2.msra.mxu0 0.0
    %280 = vmatprep.subr.mxu0 0.0
    %281 = vmatpush2.msra.mxu0 0.0
    %282 = vmatprep.mubr.f32.mxu0 0.0
    %283 = vmatmul.mubr.f32.gmra.mxu0 %v216
    %v284 = vpop.f32.mrf.mxu0
    %v285 = vadd.f32 %v213, %v284
    %v286 = vpop.f32.mrf.mxu0
    %287 = vdwg.mxu0
    %v289 = vlaneseq
    %v290 = vshrl.u32 %v289, 7
    %v291 = vsub.s32 0, %v290
    %v292 = vrot.slane %v206, %v291
    %v294 = vmul.f32 %v285, %v292
    %v295 = vsel %vm121, %v294, 0.0
    %296 = vadd.xlane.f32.xlu0 %v295
    %v297 = vpop.xlane.xlu0 %296
    %v299 = vlaneseq
    %v300 = vshrl.u32 %v299, 7
    %v301 = vsub.s32 0, %v300
    %v302 = vrot.slane %v207, %v301
    %v304 = vadd.f32 %v297, %v302
    %v305 = vsub.f32 0.0, %v304
    %v306 = vmul.f32 %v305, 1.442695
    %v307 = vpow.pop %v306
    %v308 = vadd.f32 %v307, 1.0
    %v309 = vrcp.pop %v308
    %v310 = vmul.f32 1.0, %v309
    %v311 = vlaneseq
    %v312 = vand.u32 %v311, 127
    %vm313 = vcmp.eq.s32.totalorder %v312, 72
    %315 = vset.pattern.permute.xlu0 0
    %316 = vperm.xlu0 %315, %v310
    %v317 = vpop.permute.xlu0 %316
    %v319 = vsel %vm313, %v317, %v200
    %320 = vst [vmem:[#allocation2] sm:$0xff] %v319
    // Predicated region
    $region18: #{tpu_custom_call.1} parent=1 // pred_check
      _
    $region19: #{tpu_custom_call.1} parent=1 // pred_check_branch
      %322 = sbr.rel (0) target = $region21
    $region20: #{tpu_custom_call.1} parent=1 // pred_region
      %s324 = ssub.s32 128, 128
      %325 = vsyncadd [#allocation3], %s324
      %s327 = sshll.u32 [#allocation2], 4
      %s328 = int_to_ptr.vmem [resolvable:$true] %s327
      %330 = dma.vmem_to_hbm [thread:$0]  %s328, 128, %s4, [#allocation3]
    $region21: #{tpu_custom_call.1} parent=1 // pred_fallthru
      _
    // Predicated region
    $region22: #{tpu_custom_call.1} parent=1 // pred_check
      _
    $region23: #{tpu_custom_call.1} parent=1 // pred_check_branch
      %332 = sbr.rel (0) target = $region25
    $region24: #{tpu_custom_call.1} parent=1 // pred_region
      %333 = dma.done [#allocation3], 128
    $region25: #{tpu_custom_call.1} parent=1 // pred_fallthru
      _
    %334 = vsyncpa [#allocation3], 1

</llo_original>
